<compile_context>
chip_gen: v6e
topology: v6e:2x2x1
jax: 0.10.0
libtpu: 0.0.40
codegen_flags: <defaults>
</compile_context>

<pallas_src>
import functools
import math

import jax
import jax.numpy as jnp
from jax.experimental import pallas as pl
from jax.experimental.pallas import tpu as pltpu


_LANE = 128
# Below this, a pallas_call is pure overhead versus a free metadata reshape.
_MIN_COPY_BYTES = 1 * 1024 * 1024


def _sublane_granule(itemsize: int) -> int:
    # Native packed tiles: f32 -> (8,128), bf16/f16 -> (16,128), int8/fp8 -> (32,128).
    return max(8, (8 * 4) // itemsize)


def _tpu_block_budget() -> tuple[int, int]:
    """Return (target block bytes, scoped vmem_limit bytes) per TPU generation."""
    try:
        vmem = pltpu.get_tpu_info().vmem_capacity_bytes
    except Exception:
        vmem = 64 * 1024 * 1024  # conservative default (v7x-sized)
    if vmem >= 96 * 1024 * 1024:
        # v5e / v6e: 128 MiB physical VMEM -> bigger blocks, fewer grid steps.
        return 8 * 1024 * 1024, 64 * 1024 * 1024
    # v7x: 64 MiB physical VMEM -> 4 MiB blocks, modest scoped limit.
    return 4 * 1024 * 1024, 32 * 1024 * 1024


def _pick_layout(total: int, itemsize: int):
    """Factor `total` into (rows, lanes) with rows % granule == 0 and
    lanes % 128 == 0, and pick tm as an exact divisor of rows (multiple of the
    dtype-aware sublane granule) near the per-generation block-size target.
    Returns (rows, lanes, tm, vmem_limit) or None if no such factoring exists."""
    if total <= 0:
        return None
    granule = _sublane_granule(itemsize)
    lanes = None
    for cand in (8 * _LANE, 4 * _LANE, 2 * _LANE, _LANE):  # 1024, 512, 256, 128
        if total % (cand * granule) == 0:
            lanes = cand
            break
    if lanes is None:
        return None
    rows = total // lanes  # guaranteed multiple of granule

    target_bytes, vmem_limit = _tpu_block_budget()
    rows_target = max(granule, (target_bytes // (lanes * itemsize)) // granule * granule)

    # Cap at rows/2 (granule-rounded) when possible so the grid has >= 2 steps
    # and v7x's two TensorCores can both participate via the "parallel" axis.
    cap = rows_target
    if rows >= 2 * granule:
        cap = min(cap, (rows // 2) // granule * granule)
    cap = max(cap, granule)

    # Largest exact divisor of rows that is a multiple of granule and <= cap.
    tm = granule
    d = cap - (cap % granule)
    while d >= granule:
        if rows % d == 0:
            tm = d
            break
        d -= granule
    return rows, lanes, tm, vmem_limit


def _copy_kernel(x_ref, o_ref):
    # Minimal vld -> vst streaming identity copy of one (tm, lanes) block.
    o_ref[...] = x_ref[...]


@functools.partial(jax.jit, static_argnames=("rows", "lanes", "tm", "vmem_limit"))
def _flatten_copy(flat: jax.Array, rows: int, lanes: int, tm: int,
                  vmem_limit: int) -> jax.Array:
    """Lane-dense tiled identity copy of `flat` viewed as a (rows, lanes) slab."""
    x2d = flat.reshape(rows, lanes)  # free metadata reshape
    itemsize = jnp.dtype(flat.dtype).itemsize
    out2d = pl.pallas_call(
        _copy_kernel,
        out_shape=jax.ShapeDtypeStruct((rows, lanes), x2d.dtype),
        grid_spec=pltpu.PrefetchScalarGridSpec(
            num_scalar_prefetch=0,
            grid=(rows // tm,),  # tm divides rows exactly: no masked tail block
            in_specs=[pl.BlockSpec((tm, lanes), lambda i: (i, 0))],
            out_specs=pl.BlockSpec((tm, lanes), lambda i: (i, 0)),
        ),
        compiler_params=pltpu.CompilerParams(
            dimension_semantics=("parallel",),
            vmem_limit_bytes=vmem_limit,
        ),
        cost_estimate=pl.CostEstimate(
            flops=0,
            transcendentals=0,
            bytes_accessed=2 * rows * lanes * itemsize,
        ),
    )(x2d)
    return out2d.reshape(-1)


def flatten_pallas(x: jax.Array, full: bool = False,
                   materialize: bool = False) -> jax.Array:
    """Pallas equivalent of Flatten.forward.

    full=False -> shape (x.shape[0], prod(rest))
    full=True  -> shape (prod(all),)

    By default this is a free metadata reshape (no kernel, no HBM traffic).
    Set materialize=True to force a fresh, defragmented output buffer via a
    lane-dense Pallas streaming copy.
    """
    n = x.shape[0] if x.ndim else 1
    total = math.prod(x.shape) if x.ndim else 1
    if full:
        target_shape = (total,)
    else:
        target_shape = (n, total // n if n > 0 else 0)

    itemsize = jnp.dtype(x.dtype).itemsize
    # Fast path (default): flatten is free -- do not pay 2x HBM traffic.
    if not materialize or total * itemsize < _MIN_COPY_BYTES:
        return x.reshape(target_shape)

    layout = _pick_layout(total, itemsize)
    if layout is None:
        # Shapes that don't factor into (granule*k, 128*m) tiles: metadata
        # reshape only (never force an HBM round trip through an awkward tiling).
        return x.reshape(target_shape)

    rows, lanes, tm, vmem_limit = layout
    out_flat = _flatten_copy(x.reshape(total), rows, lanes, tm, vmem_limit)
    return out_flat.reshape(target_shape)


if __name__ == "__main__":
    key = jax.random.PRNGKey(0)

    # Small NCHW input consistent with a conv-net tail: batch=2, C=4, H=W=16.
    x = jax.random.normal(key, (2, 4, 16, 16), dtype=jnp.float32)

    # full=False: (2, 4*16*16) = (2, 1024) -- default (free reshape) path.
    y = jax.block_until_ready(flatten_pallas(x, full=False))
    assert y.shape == (2, 1024), y.shape
    assert jnp.array_equal(y, x.reshape(x.shape[0], -1)), "mismatch for full=False"

    # full=True: (2*4*16*16,) = (2048,)
    z = jax.block_until_ready(flatten_pallas(x, full=True))
    assert z.shape == (2048,), z.shape
    assert jnp.array_equal(z, x.reshape(-1)), "mismatch for full=True"

    # Non-(granule*128)-divisible shape exercises the metadata-reshape fallback.
    x_odd = jax.random.normal(key, (2, 3, 5, 7), dtype=jnp.float32)
    w = jax.block_until_ready(flatten_pallas(x_odd, full=False, materialize=True))
    assert w.shape == (2, 105), w.shape
    assert jnp.array_equal(w, x_odd.reshape(2, -1)), "mismatch for odd shape"

    # Medium input (2 MiB f32) with materialize=True exercises the Pallas copy
    # kernel (multi-block pipelined path, grid >= 2).
    x_mid = jax.random.normal(key, (8, 16, 32, 128), dtype=jnp.float32)
    ym = jax.block_until_ready(flatten_pallas(x_mid, full=False, materialize=True))
    assert ym.shape == (8, 16 * 32 * 128), ym.shape
    assert jnp.array_equal(ym, x_mid.reshape(8, -1)), "mismatch for materialized copy"

    zm = jax.block_until_ready(flatten_pallas(x_mid, full=True, materialize=True))
    assert zm.shape == (8 * 16 * 32 * 128,), zm.shape
    assert jnp.array_equal(zm, x_mid.reshape(-1)), "mismatch for materialized full=True"

    print("KERNEL_OK")
</pallas_src>

<mosaic_0001>
module attributes {stable_mosaic.version = 11 : i64} {
  func.func @_copy_kernel(%arg0: i32, %arg1: memref<256x1024xf32, #tpu.memory_space<vmem>>, %arg2: memref<256x1024xf32, #tpu.memory_space<vmem>>) attributes {dimension_semantics = [#tpu.dimension_semantics<parallel>], iteration_bounds = array<i64: 2>, scalar_prefetch = 0 : i64, scratch_operands = 0 : i64, tpu.core_type = #tpu.core_type<tc>, window_params = [{transform_indices = @transform_0, window_bounds = array<i64: 256, 1024>}, {transform_indices = @transform_1, window_bounds = array<i64: 256, 1024>}]} {
    %c0 = arith.constant 0 : index
    %c0_0 = arith.constant 0 : index
    %0 = vector.load %arg1[%c0, %c0_0] : memref<256x1024xf32, #tpu.memory_space<vmem>>, vector<256x1024xf32>
    %c0_1 = arith.constant 0 : index
    %c0_2 = arith.constant 0 : index
    %1 = vector.load %arg2[%c0_1, %c0_2] : memref<256x1024xf32, #tpu.memory_space<vmem>>, vector<256x1024xf32>
    tpu.vector_store %arg2[%c0_1, %c0_2], %0 {strides = array<i32>} : memref<256x1024xf32, #tpu.memory_space<vmem>>, vector<256x1024xf32>,
    return
  }
  func.func @transform_0(%arg0: i32) -> (i32, i32) {
    %c0_i32 = arith.constant 0 : i32
    %c0_i32_0 = arith.constant 0 : i32
    return %arg0, %c0_i32 : i32, i32
  }
  func.func @transform_1(%arg0: i32) -> (i32, i32) {
    %c0_i32 = arith.constant 0 : i32
    %c0_i32_0 = arith.constant 0 : i32
    return %arg0, %c0_i32 : i32, i32
  }
}

</mosaic_0001>

<llo_original>
// kernel: _flatten_copy.1
$region0: #{_flatten_copy.1}
  #allocation0 [shape = 'u32[]', space=smem, size = 0x4, offset = 0x4, fixed_abs, tag = 'smem constant byte address 0x4 - core index']
  #allocation1 [shape = 'u32[144,128]{1,0:T(1,128)}', space=vmem, size = 0x12000, scoped, tag = 'internal scratch']
  %s0 = inlined_call_operand.vmem [shape: f32[512,1024], index: 0, kind: input, shape index: {}]
  %s1 = inlined_call_operand.vmem [shape: f32[512,1024], index: 1, kind: output, shape index: {}]
  %s2 = sld [smem:[#allocation0]]
  $region37: #{_flatten_copy.1} parent=0
    _
  %s4 = ssub.s32 1, %s2
  %s5 = scalar_select 0, %s4, %s2
  loop: start=0, step=1, limit=4
  $region2: #{_flatten_copy.1} parent=0 // loop_pre_header
    _
  $region3: #{_flatten_copy.1} parent=0 // loop_header
    %s7 = sphi 0, %s11
    %p8 = scmp.ge.s32.totalorder %s7, 4
    %s17 = sphi 0, %s19
    %s20 = sphi 0, %s17
    %s21 = sphi 0, %s20
    %s37 = sphi 0, %s21
    %s43 = sphi 0, %s45
    %s46 = sphi 0, %s43
    %s47 = sphi 0, %s46
    %s63 = sphi 0, %s47
  $region4: #{_flatten_copy.1} parent=0 // loop_header_branch
    %10 = sbr.rel (%p8) target = $region8
  $region5: #{_flatten_copy.1} parent=0 // loop_body
    %s12 = ssub.s32 %s7, 1
    %s13 = ssub.s32 %s7, 2
    %s14 = sadd.s32 %s7, 1
    %s15 = ssub.s32 %s7, %s14
    %p16 = scmp.eq.s32.totalorder %s15, 0
    %s18 = sadd.s32 %s17, 1
    %s19 = scalar_select %p16, %s17, %s18
    %p22 = pneg %p16
    %p23 = scmp.eq.s32.totalorder %s7, 1
    %p24 = por %p22, %p23
    %p25 = scmp.ne.s32.totalorder %s17, %s20
    %p26 = scmp.eq.s32.totalorder %s7, 0
    %p27 = por %p25, %p26
    %p28 = scmp.ne.s32.totalorder %s17, %s20
    %p29 = scmp.eq.s32.totalorder %s12, 1
    %p30 = por %p28, %p29
    %p31 = scmp.ne.s32.totalorder %s20, %s21
    %p32 = scmp.eq.s32.totalorder %s12, 0
    %p33 = por %p31, %p32
    %p34 = scmp.ne.s32.totalorder %s20, %s21
    %p35 = scmp.eq.s32.totalorder %s13, 1
    %p36 = por %p34, %p35
    %p38 = scmp.ne.s32.totalorder %s21, %s37
    %p39 = scmp.eq.s32.totalorder %s13, 0
    %p40 = por %p38, %p39
    %s41 = ssub.s32 %s7, %s14
    %p42 = scmp.eq.s32.totalorder %s41, 0
    %s44 = sadd.s32 %s43, 1
    %s45 = scalar_select %p42, %s43, %s44
    %p48 = pneg %p42
    %p49 = scmp.eq.s32.totalorder %s7, 1
    %p50 = por %p48, %p49
    %p51 = scmp.ne.s32.totalorder %s43, %s46
    %p52 = scmp.eq.s32.totalorder %s7, 0
    %p53 = por %p51, %p52
    %p54 = scmp.ne.s32.totalorder %s43, %s46
    %p55 = scmp.eq.s32.totalorder %s12, 1
    %p56 = por %p54, %p55
    %p57 = scmp.ne.s32.totalorder %s46, %s47
    %p58 = scmp.eq.s32.totalorder %s12, 0
    %p59 = por %p57, %p58
    %p60 = scmp.ne.s32.totalorder %s46, %s47
    %p61 = scmp.eq.s32.totalorder %s13, 1
    %p62 = por %p60, %p61
    %p64 = scmp.ne.s32.totalorder %s47, %s63
    %p65 = scmp.eq.s32.totalorder %s13, 0
    %p66 = por %p64, %p65
    %p67 = scmp.le.s32.totalorder 1, %s7
    %p68 = scmp.lt.s32.totalorder %s7, 3
    %p69 = pnand %p67, %p68
    %p70 = pneg %p69
    // Predicated region
    $region9: #{_flatten_copy.1} parent=5 // pred_check
      _
    $region10: #{_flatten_copy.1} parent=5 // pred_check_branch
      %72 = sbr.rel (%p69) target = $region12
    $region11: #{_flatten_copy.1} parent=5 // pred_region
      %s73 = ssub.s32 %s7, 1
    $region12: #{_flatten_copy.1} parent=5 // pred_fallthru
      _
    %p74 = scmp.lt.s32.totalorder %s7, 2
    // Predicated region
    $region13: #{_flatten_copy.1} parent=5 // pred_check
      %p75 = pneg %p74
    $region14: #{_flatten_copy.1} parent=5 // pred_check_branch
      %77 = sbr.rel (%p75) target = $region16
    $region15: #{_flatten_copy.1} parent=5 // pred_region
      // Predicated region
      $region17: #{_flatten_copy.1} parent=15 // pred_check
        %p78 = pneg %p27
      $region18: #{_flatten_copy.1} parent=15 // pred_check_branch
        %80 = sbr.rel (%p78) target = $region20
      $region19: #{_flatten_copy.1} parent=15 // pred_region
        %s81 = smul.u32 32, %s7
        %p82 = scmp.lt.s32.totalorder %s81, 63
        %s83 = scalar_select %p82, %s81, 63
        %s84 = smul.addr %s83, 8
        %s85 = smul.addr %s84, 8
        %s86 = scalar_lea.vmem %s0, %s85
        %s87 = smul.u32 32, %s7
      $region20: #{_flatten_copy.1} parent=15 // pred_fallthru
        _
    $region16: #{_flatten_copy.1} parent=5 // pred_fallthru
      _
    %p88 = scmp.le.s32.totalorder 1, %s7
    %p89 = scmp.lt.s32.totalorder %s7, 3
    %p90 = pnand %p88, %p89
    %p91 = pneg %p90
    // Predicated region
    $region21: #{_flatten_copy.1} parent=5 // pred_check
      _
    $region22: #{_flatten_copy.1} parent=5 // pred_check_branch
      %93 = sbr.rel (%p90) target = $region24
    $region23: #{_flatten_copy.1} parent=5 // pred_region
      %s94 = ssub.s32 %s7, 1
      %s95 = smul.u32 32, %s12
      %p96 = scmp.lt.s32.totalorder %s95, 63
      %s97 = scalar_select %p96, %s95, 63
      %s98 = smul.addr %s97, 8
      %s99 = smul.addr %s98, 8
      %s100 = scalar_lea.vmem %s0, %s99
      %p101 = pneg %p33
      %p102 = pneg %p30
      %p103 = pneg %p59
      %p104 = pneg %p56
      %s105 = smul.u32 32, %s12
      %p106 = scmp.lt.s32.totalorder %s105, 63
      %s107 = scalar_select %p106, %s105, 63
      %s108 = smul.addr %s107, 8
      %s109 = smul.addr %s108, 8
      %s110 = scalar_lea.vmem %s1, %s109
      %s111 = smul.u32 32, %s12
      %p112 = scmp.lt.s32.totalorder %s111, 63
      %s113 = scalar_select %p112, %s111, 63
      %s114 = smul.addr %s113, 8
      %s115 = smul.addr %s114, 8
      %s116 = scalar_lea.vmem %s0, %s115
      %s117 = smul.u32 32, %s12
      %s118 = smul.u32 32, %s12
      %p119 = scmp.lt.s32.totalorder %s118, 63
      %s120 = scalar_select %p119, %s118, 63
      %s121 = smul.addr %s120, 8
      %s122 = smul.addr %s121, 8
      %s123 = scalar_lea.vmem %s1, %s122
      %s124 = smul.u32 32, %s12
      %v125 = vld [vmem:[%s116] sm:$0xff]
      %v126 = vld [vmem:[%s116 + $0x8] sm:$0xff]
      %v127 = vld [vmem:[%s116 + $0x10] sm:$0xff]
      %v128 = vld [vmem:[%s116 + $0x18] sm:$0xff]
      %v129 = vld [vmem:[%s116 + $0x20] sm:$0xff]
      %v130 = vld [vmem:[%s116 + $0x28] sm:$0xff]
      %v131 = vld [vmem:[%s116 + $0x30] sm:$0xff]
      %v132 = vld [vmem:[%s116 + $0x38] sm:$0xff]
      %v133 = vld [vmem:[%s116 + $0x40] sm:$0xff]
      %v134 = vld [vmem:[%s116 + $0x48] sm:$0xff]
      %v135 = vld [vmem:[%s116 + $0x50] sm:$0xff]
      %v136 = vld [vmem:[%s116 + $0x58] sm:$0xff]
      %v137 = vld [vmem:[%s116 + $0x60] sm:$0xff]
      %v138 = vld [vmem:[%s116 + $0x68] sm:$0xff]
      %v139 = vld [vmem:[%s116 + $0x70] sm:$0xff]
      %v140 = vld [vmem:[%s116 + $0x78] sm:$0xff]
      %v141 = vld [vmem:[%s116 + $0x80] sm:$0xff]
      %v142 = vld [vmem:[%s116 + $0x88] sm:$0xff]
      %v143 = vld [vmem:[%s116 + $0x90] sm:$0xff]
      %v144 = vld [vmem:[%s116 + $0x98] sm:$0xff]
      %v145 = vld [vmem:[%s116 + $0xa0] sm:$0xff]
      %v146 = vld [vmem:[%s116 + $0xa8] sm:$0xff]
      %v147 = vld [vmem:[%s116 + $0xb0] sm:$0xff]
      %v148 = vld [vmem:[%s116 + $0xb8] sm:$0xff]
      %v149 = vld [vmem:[%s116 + $0xc0] sm:$0xff]
      %v150 = vld [vmem:[%s116 + $0xc8] sm:$0xff]
      %v151 = vld [vmem:[%s116 + $0xd0] sm:$0xff]
      %v152 = vld [vmem:[%s116 + $0xd8] sm:$0xff]
      %v153 = vld [vmem:[%s116 + $0xe0] sm:$0xff]
      %v154 = vld [vmem:[%s116 + $0xe8] sm:$0xff]
      %v155 = vld [vmem:[%s116 + $0xf0] sm:$0xff]
      %v156 = vld [vmem:[%s116 + $0xf8] sm:$0xff]
      %v157 = vld [vmem:[%s116 + $0x100] sm:$0xff]
      %v158 = vld [vmem:[%s116 + $0x108] sm:$0xff]
      %v159 = vld [vmem:[%s116 + $0x110] sm:$0xff]
      %v160 = vld [vmem:[%s116 + $0x118] sm:$0xff]
      %v161 = vld [vmem:[%s116 + $0x120] sm:$0xff]
      %v162 = vld [vmem:[%s116 + $0x128] sm:$0xff]
      %v163 = vld [vmem:[%s116 + $0x130] sm:$0xff]
      %v164 = vld [vmem:[%s116 + $0x138] sm:$0xff]
      %v165 = vld [vmem:[%s116 + $0x140] sm:$0xff]
      %v166 = vld [vmem:[%s116 + $0x148] sm:$0xff]
      %v167 = vld [vmem:[%s116 + $0x150] sm:$0xff]
      %v168 = vld [vmem:[%s116 + $0x158] sm:$0xff]
      %v169 = vld [vmem:[%s116 + $0x160] sm:$0xff]
      %v170 = vld [vmem:[%s116 + $0x168] sm:$0xff]
      %v171 = vld [vmem:[%s116 + $0x170] sm:$0xff]
      %v172 = vld [vmem:[%s116 + $0x178] sm:$0xff]
      %v173 = vld [vmem:[%s116 + $0x180] sm:$0xff]
      %v174 = vld [vmem:[%s116 + $0x188] sm:$0xff]
      %v175 = vld [vmem:[%s116 + $0x190] sm:$0xff]
      %v176 = vld [vmem:[%s116 + $0x198] sm:$0xff]
      %v177 = vld [vmem:[%s116 + $0x1a0] sm:$0xff]
      %v178 = vld [vmem:[%s116 + $0x1a8] sm:$0xff]
      %v179 = vld [vmem:[%s116 + $0x1b0] sm:$0xff]
      %v180 = vld [vmem:[%s116 + $0x1b8] sm:$0xff]
      %v181 = vld [vmem:[%s116 + $0x1c0] sm:$0xff]
      %v182 = vld [vmem:[%s116 + $0x1c8] sm:$0xff]
      %v183 = vld [vmem:[%s116 + $0x1d0] sm:$0xff]
      %v184 = vld [vmem:[%s116 + $0x1d8] sm:$0xff]
      %v185 = vld [vmem:[%s116 + $0x1e0] sm:$0xff]
      %v186 = vld [vmem:[%s116 + $0x1e8] sm:$0xff]
      %v187 = vld [vmem:[%s116 + $0x1f0] sm:$0xff]
      %v188 = vld [vmem:[%s116 + $0x1f8] sm:$0xff]
      %v189 = vld [vmem:[%s116 + $0x200] sm:$0xff]
      %v190 = vld [vmem:[%s116 + $0x208] sm:$0xff]
      %v191 = vld [vmem:[%s116 + $0x210] sm:$0xff]
      %v192 = vld [vmem:[%s116 + $0x218] sm:$0xff]
      %v193 = vld [vmem:[%s116 + $0x220] sm:$0xff]
      %v194 = vld [vmem:[%s116 + $0x228] sm:$0xff]
      %v195 = vld [vmem:[%s116 + $0x230] sm:$0xff]
      %v196 = vld [vmem:[%s116 + $0x238] sm:$0xff]
      %v197 = vld [vmem:[%s116 + $0x240] sm:$0xff]
      %v198 = vld [vmem:[%s116 + $0x248] sm:$0xff]
      %v199 = vld [vmem:[%s116 + $0x250] sm:$0xff]
      %v200 = vld [vmem:[%s116 + $0x258] sm:$0xff]
      %v201 = vld [vmem:[%s116 + $0x260] sm:$0xff]
      %v202 = vld [vmem:[%s116 + $0x268] sm:$0xff]
      %v203 = vld [vmem:[%s116 + $0x270] sm:$0xff]
      %v204 = vld [vmem:[%s116 + $0x278] sm:$0xff]
      %v205 = vld [vmem:[%s116 + $0x280] sm:$0xff]
      %v206 = vld [vmem:[%s116 + $0x288] sm:$0xff]
      %v207 = vld [vmem:[%s116 + $0x290] sm:$0xff]
      %v208 = vld [vmem:[%s116 + $0x298] sm:$0xff]
      %v209 = vld [vmem:[%s116 + $0x2a0] sm:$0xff]
      %v210 = vld [vmem:[%s116 + $0x2a8] sm:$0xff]
      %v211 = vld [vmem:[%s116 + $0x2b0] sm:$0xff]
      %v212 = vld [vmem:[%s116 + $0x2b8] sm:$0xff]
      %v213 = vld [vmem:[%s116 + $0x2c0] sm:$0xff]
      %v214 = vld [vmem:[%s116 + $0x2c8] sm:$0xff]
      %v215 = vld [vmem:[%s116 + $0x2d0] sm:$0xff]
      %v216 = vld [vmem:[%s116 + $0x2d8] sm:$0xff]
      %v217 = vld [vmem:[%s116 + $0x2e0] sm:$0xff]
      %v218 = vld [vmem:[%s116 + $0x2e8] sm:$0xff]
      %v219 = vld [vmem:[%s116 + $0x2f0] sm:$0xff]
      %v220 = vld [vmem:[%s116 + $0x2f8] sm:$0xff]
      %v221 = vld [vmem:[%s116 + $0x300] sm:$0xff]
      %v222 = vld [vmem:[%s116 + $0x308] sm:$0xff]
      %v223 = vld [vmem:[%s116 + $0x310] sm:$0xff]
      %v224 = vld [vmem:[%s116 + $0x318] sm:$0xff]
      %v225 = vld [vmem:[%s116 + $0x320] sm:$0xff]
      %v226 = vld [vmem:[%s116 + $0x328] sm:$0xff]
      %v227 = vld [vmem:[%s116 + $0x330] sm:$0xff]
      %v228 = vld [vmem:[%s116 + $0x338] sm:$0xff]
      %v229 = vld [vmem:[%s116 + $0x340] sm:$0xff]
      %v230 = vld [vmem:[%s116 + $0x348] sm:$0xff]
      %v231 = vld [vmem:[%s116 + $0x350] sm:$0xff]
      %v232 = vld [vmem:[%s116 + $0x358] sm:$0xff]
      %v233 = vld [vmem:[%s116 + $0x360] sm:$0xff]
      %v234 = vld [vmem:[%s116 + $0x368] sm:$0xff]
      %v235 = vld [vmem:[%s116 + $0x370] sm:$0xff]
      %v236 = vld [vmem:[%s116 + $0x378] sm:$0xff]
      %v237 = vld [vmem:[%s116 + $0x380] sm:$0xff]
      %v238 = vld [vmem:[%s116 + $0x388] sm:$0xff]
      %v239 = vld [vmem:[%s116 + $0x390] sm:$0xff]
      %v240 = vld [vmem:[%s116 + $0x398] sm:$0xff]
      %v241 = vld [vmem:[%s116 + $0x3a0] sm:$0xff]
      %v242 = vld [vmem:[%s116 + $0x3a8] sm:$0xff]
      %v243 = vld [vmem:[%s116 + $0x3b0] sm:$0xff]
      %v244 = vld [vmem:[%s116 + $0x3b8] sm:$0xff]
      %v245 = vld [vmem:[%s116 + $0x3c0] sm:$0xff]
      %v246 = vld [vmem:[%s116 + $0x3c8] sm:$0xff]
      %v247 = vld [vmem:[%s116 + $0x3d0] sm:$0xff]
      %v248 = vld [vmem:[%s116 + $0x3d8] sm:$0xff]
      %v249 = vld [vmem:[%s116 + $0x3e0] sm:$0xff]
      %v250 = vld [vmem:[%s116 + $0x3e8] sm:$0xff]
      %v251 = vld [vmem:[%s116 + $0x3f0] sm:$0xff]
      %v252 = vld [vmem:[%s116 + $0x3f8] sm:$0xff]
      %v253 = vld [vmem:[%s116 + $0x400] sm:$0xff]
      %v254 = vld [vmem:[%s116 + $0x408] sm:$0xff]
      %v255 = vld [vmem:[%s116 + $0x410] sm:$0xff]
      %v256 = vld [vmem:[%s116 + $0x418] sm:$0xff]
      %v257 = vld [vmem:[%s116 + $0x420] sm:$0xff]
      %v258 = vld [vmem:[%s116 + $0x428] sm:$0xff]
      %v259 = vld [vmem:[%s116 + $0x430] sm:$0xff]
      %v260 = vld [vmem:[%s116 + $0x438] sm:$0xff]
      %v261 = vld [vmem:[%s116 + $0x440] sm:$0xff]
      %v262 = vld [vmem:[%s116 + $0x448] sm:$0xff]
      %v263 = vld [vmem:[%s116 + $0x450] sm:$0xff]
      %v264 = vld [vmem:[%s116 + $0x458] sm:$0xff]
      %v265 = vld [vmem:[%s116 + $0x460] sm:$0xff]
      %v266 = vld [vmem:[%s116 + $0x468] sm:$0xff]
      %v267 = vld [vmem:[%s116 + $0x470] sm:$0xff]
      %v268 = vld [vmem:[%s116 + $0x478] sm:$0xff]
      %v269 = vld [vmem:[%s116 + $0x480] sm:$0xff]
      %v270 = vld [vmem:[%s116 + $0x488] sm:$0xff]
      %v271 = vld [vmem:[%s116 + $0x490] sm:$0xff]
      %v272 = vld [vmem:[%s116 + $0x498] sm:$0xff]
      %v273 = vld [vmem:[%s116 + $0x4a0] sm:$0xff]
      %v274 = vld [vmem:[%s116 + $0x4a8] sm:$0xff]
      %v275 = vld [vmem:[%s116 + $0x4b0] sm:$0xff]
      %v276 = vld [vmem:[%s116 + $0x4b8] sm:$0xff]
      %v277 = vld [vmem:[%s116 + $0x4c0] sm:$0xff]
      %v278 = vld [vmem:[%s116 + $0x4c8] sm:$0xff]
      %v279 = vld [vmem:[%s116 + $0x4d0] sm:$0xff]
      %v280 = vld [vmem:[%s116 + $0x4d8] sm:$0xff]
      %v281 = vld [vmem:[%s116 + $0x4e0] sm:$0xff]
      %v282 = vld [vmem:[%s116 + $0x4e8] sm:$0xff]
      %v283 = vld [vmem:[%s116 + $0x4f0] sm:$0xff]
      %v284 = vld [vmem:[%s116 + $0x4f8] sm:$0xff]
      %v285 = vld [vmem:[%s116 + $0x500] sm:$0xff]
      %v286 = vld [vmem:[%s116 + $0x508] sm:$0xff]
      %v287 = vld [vmem:[%s116 + $0x510] sm:$0xff]
      %v288 = vld [vmem:[%s116 + $0x518] sm:$0xff]
      %v289 = vld [vmem:[%s116 + $0x520] sm:$0xff]
      %v290 = vld [vmem:[%s116 + $0x528] sm:$0xff]
      %v291 = vld [vmem:[%s116 + $0x530] sm:$0xff]
      %v292 = vld [vmem:[%s116 + $0x538] sm:$0xff]
      %v293 = vld [vmem:[%s116 + $0x540] sm:$0xff]
      %v294 = vld [vmem:[%s116 + $0x548] sm:$0xff]
      %v295 = vld [vmem:[%s116 + $0x550] sm:$0xff]
      %v296 = vld [vmem:[%s116 + $0x558] sm:$0xff]
      %v297 = vld [vmem:[%s116 + $0x560] sm:$0xff]
      %v298 = vld [vmem:[%s116 + $0x568] sm:$0xff]
      %v299 = vld [vmem:[%s116 + $0x570] sm:$0xff]
      %v300 = vld [vmem:[%s116 + $0x578] sm:$0xff]
      %v301 = vld [vmem:[%s116 + $0x580] sm:$0xff]
      %v302 = vld [vmem:[%s116 + $0x588] sm:$0xff]
      %v303 = vld [vmem:[%s116 + $0x590] sm:$0xff]
      %v304 = vld [vmem:[%s116 + $0x598] sm:$0xff]
      %v305 = vld [vmem:[%s116 + $0x5a0] sm:$0xff]
      %v306 = vld [vmem:[%s116 + $0x5a8] sm:$0xff]
      %v307 = vld [vmem:[%s116 + $0x5b0] sm:$0xff]
      %v308 = vld [vmem:[%s116 + $0x5b8] sm:$0xff]
      %v309 = vld [vmem:[%s116 + $0x5c0] sm:$0xff]
      %v310 = vld [vmem:[%s116 + $0x5c8] sm:$0xff]
      %v311 = vld [vmem:[%s116 + $0x5d0] sm:$0xff]
      %v312 = vld [vmem:[%s116 + $0x5d8] sm:$0xff]
      %v313 = vld [vmem:[%s116 + $0x5e0] sm:$0xff]
      %v314 = vld [vmem:[%s116 + $0x5e8] sm:$0xff]
      %v315 = vld [vmem:[%s116 + $0x5f0] sm:$0xff]
      %v316 = vld [vmem:[%s116 + $0x5f8] sm:$0xff]
      %v317 = vld [vmem:[%s116 + $0x600] sm:$0xff]
      %v318 = vld [vmem:[%s116 + $0x608] sm:$0xff]
      %v319 = vld [vmem:[%s116 + $0x610] sm:$0xff]
      %v320 = vld [vmem:[%s116 + $0x618] sm:$0xff]
      %v321 = vld [vmem:[%s116 + $0x620] sm:$0xff]
      %v322 = vld [vmem:[%s116 + $0x628] sm:$0xff]
      %v323 = vld [vmem:[%s116 + $0x630] sm:$0xff]
      %v324 = vld [vmem:[%s116 + $0x638] sm:$0xff]
      %v325 = vld [vmem:[%s116 + $0x640] sm:$0xff]
      %v326 = vld [vmem:[%s116 + $0x648] sm:$0xff]
      %v327 = vld [vmem:[%s116 + $0x650] sm:$0xff]
      %v328 = vld [vmem:[%s116 + $0x658] sm:$0xff]
      %v329 = vld [vmem:[%s116 + $0x660] sm:$0xff]
      %v330 = vld [vmem:[%s116 + $0x668] sm:$0xff]
      %v331 = vld [vmem:[%s116 + $0x670] sm:$0xff]
      %v332 = vld [vmem:[%s116 + $0x678] sm:$0xff]
      %v333 = vld [vmem:[%s116 + $0x680] sm:$0xff]
      %v334 = vld [vmem:[%s116 + $0x688] sm:$0xff]
      %v335 = vld [vmem:[%s116 + $0x690] sm:$0xff]
      %v336 = vld [vmem:[%s116 + $0x698] sm:$0xff]
      %v337 = vld [vmem:[%s116 + $0x6a0] sm:$0xff]
      %v338 = vld [vmem:[%s116 + $0x6a8] sm:$0xff]
      %v339 = vld [vmem:[%s116 + $0x6b0] sm:$0xff]
      %v340 = vld [vmem:[%s116 + $0x6b8] sm:$0xff]
      %v341 = vld [vmem:[%s116 + $0x6c0] sm:$0xff]
      %v342 = vld [vmem:[%s116 + $0x6c8] sm:$0xff]
      %v343 = vld [vmem:[%s116 + $0x6d0] sm:$0xff]
      %v344 = vld [vmem:[%s116 + $0x6d8] sm:$0xff]
      %v345 = vld [vmem:[%s116 + $0x6e0] sm:$0xff]
      %v346 = vld [vmem:[%s116 + $0x6e8] sm:$0xff]
      %v347 = vld [vmem:[%s116 + $0x6f0] sm:$0xff]
      %v348 = vld [vmem:[%s116 + $0x6f8] sm:$0xff]
      %v349 = vld [vmem:[%s116 + $0x700] sm:$0xff]
      %v350 = vld [vmem:[%s116 + $0x708] sm:$0xff]
      %v351 = vld [vmem:[%s116 + $0x710] sm:$0xff]
      %v352 = vld [vmem:[%s116 + $0x718] sm:$0xff]
      %v353 = vld [vmem:[%s116 + $0x720] sm:$0xff]
      %v354 = vld [vmem:[%s116 + $0x728] sm:$0xff]
      %v355 = vld [vmem:[%s116 + $0x730] sm:$0xff]
      %v356 = vld [vmem:[%s116 + $0x738] sm:$0xff]
      %v357 = vld [vmem:[%s116 + $0x740] sm:$0xff]
      %v358 = vld [vmem:[%s116 + $0x748] sm:$0xff]
      %v359 = vld [vmem:[%s116 + $0x750] sm:$0xff]
      %v360 = vld [vmem:[%s116 + $0x758] sm:$0xff]
      %v361 = vld [vmem:[%s116 + $0x760] sm:$0xff]
      %v362 = vld [vmem:[%s116 + $0x768] sm:$0xff]
      %v363 = vld [vmem:[%s116 + $0x770] sm:$0xff]
      %v364 = vld [vmem:[%s116 + $0x778] sm:$0xff]
      %v365 = vld [vmem:[%s116 + $0x780] sm:$0xff]
      %v366 = vld [vmem:[%s116 + $0x788] sm:$0xff]
      %v367 = vld [vmem:[%s116 + $0x790] sm:$0xff]
      %v368 = vld [vmem:[%s116 + $0x798] sm:$0xff]
      %v369 = vld [vmem:[%s116 + $0x7a0] sm:$0xff]
      %v370 = vld [vmem:[%s116 + $0x7a8] sm:$0xff]
      %v371 = vld [vmem:[%s116 + $0x7b0] sm:$0xff]
      %v372 = vld [vmem:[%s116 + $0x7b8] sm:$0xff]
      %v373 = vld [vmem:[%s116 + $0x7c0] sm:$0xff]
      %v374 = vld [vmem:[%s116 + $0x7c8] sm:$0xff]
      %v375 = vld [vmem:[%s116 + $0x7d0] sm:$0xff]
      %v376 = vld [vmem:[%s116 + $0x7d8] sm:$0xff]
      %v377 = vld [vmem:[%s116 + $0x7e0] sm:$0xff]
      %v378 = vld [vmem:[%s116 + $0x7e8] sm:$0xff]
      %v379 = vld [vmem:[%s116 + $0x7f0] sm:$0xff]
      %v380 = vld [vmem:[%s116 + $0x7f8] sm:$0xff]
      %381 = vst [vmem:[%s123] sm:$0xff] %v125
      %382 = vst [vmem:[%s123 + $0x8] sm:$0xff] %v126
      %383 = vst [vmem:[%s123 + $0x10] sm:$0xff] %v127
      %384 = vst [vmem:[%s123 + $0x18] sm:$0xff] %v128
      %385 = vst [vmem:[%s123 + $0x20] sm:$0xff] %v129
      %386 = vst [vmem:[%s123 + $0x28] sm:$0xff] %v130
      %387 = vst [vmem:[%s123 + $0x30] sm:$0xff] %v131
      %388 = vst [vmem:[%s123 + $0x38] sm:$0xff] %v132
      %389 = vst [vmem:[%s123 + $0x40] sm:$0xff] %v133
      %390 = vst [vmem:[%s123 + $0x48] sm:$0xff] %v134
      %391 = vst [vmem:[%s123 + $0x50] sm:$0xff] %v135
      %392 = vst [vmem:[%s123 + $0x58] sm:$0xff] %v136
      %393 = vst [vmem:[%s123 + $0x60] sm:$0xff] %v137
      %394 = vst [vmem:[%s123 + $0x68] sm:$0xff] %v138
      %395 = vst [vmem:[%s123 + $0x70] sm:$0xff] %v139
      %396 = vst [vmem:[%s123 + $0x78] sm:$0xff] %v140
      %397 = vst [vmem:[%s123 + $0x80] sm:$0xff] %v141
      %398 = vst [vmem:[%s123 + $0x88] sm:$0xff] %v142
      %399 = vst [vmem:[%s123 + $0x90] sm:$0xff] %v143
      %400 = vst [vmem:[%s123 + $0x98] sm:$0xff] %v144
      %401 = vst [vmem:[%s123 + $0xa0] sm:$0xff] %v145
      %402 = vst [vmem:[%s123 + $0xa8] sm:$0xff] %v146
      %403 = vst [vmem:[%s123 + $0xb0] sm:$0xff] %v147
      %404 = vst [vmem:[%s123 + $0xb8] sm:$0xff] %v148
      %405 = vst [vmem:[%s123 + $0xc0] sm:$0xff] %v149
      %406 = vst [vmem:[%s123 + $0xc8] sm:$0xff] %v150
      %407 = vst [vmem:[%s123 + $0xd0] sm:$0xff] %v151
      %408 = vst [vmem:[%s123 + $0xd8] sm:$0xff] %v152
      %409 = vst [vmem:[%s123 + $0xe0] sm:$0xff] %v153
      %410 = vst [vmem:[%s123 + $0xe8] sm:$0xff] %v154
      %411 = vst [vmem:[%s123 + $0xf0] sm:$0xff] %v155
      %412 = vst [vmem:[%s123 + $0xf8] sm:$0xff] %v156
      %413 = vst [vmem:[%s123 + $0x100] sm:$0xff] %v157
      %414 = vst [vmem:[%s123 + $0x108] sm:$0xff] %v158
      %415 = vst [vmem:[%s123 + $0x110] sm:$0xff] %v159
      %416 = vst [vmem:[%s123 + $0x118] sm:$0xff] %v160
      %417 = vst [vmem:[%s123 + $0x120] sm:$0xff] %v161
      %418 = vst [vmem:[%s123 + $0x128] sm:$0xff] %v162
      %419 = vst [vmem:[%s123 + $0x130] sm:$0xff] %v163
      %420 = vst [vmem:[%s123 + $0x138] sm:$0xff] %v164
      %421 = vst [vmem:[%s123 + $0x140] sm:$0xff] %v165
      %422 = vst [vmem:[%s123 + $0x148] sm:$0xff] %v166
      %423 = vst [vmem:[%s123 + $0x150] sm:$0xff] %v167
      %424 = vst [vmem:[%s123 + $0x158] sm:$0xff] %v168
      %425 = vst [vmem:[%s123 + $0x160] sm:$0xff] %v169
      %426 = vst [vmem:[%s123 + $0x168] sm:$0xff] %v170
      %427 = vst [vmem:[%s123 + $0x170] sm:$0xff] %v171
      %428 = vst [vmem:[%s123 + $0x178] sm:$0xff] %v172
      %429 = vst [vmem:[%s123 + $0x180] sm:$0xff] %v173
      %430 = vst [vmem:[%s123 + $0x188] sm:$0xff] %v174
      %431 = vst [vmem:[%s123 + $0x190] sm:$0xff] %v175
      %432 = vst [vmem:[%s123 + $0x198] sm:$0xff] %v176
      %433 = vst [vmem:[%s123 + $0x1a0] sm:$0xff] %v177
      %434 = vst [vmem:[%s123 + $0x1a8] sm:$0xff] %v178
      %435 = vst [vmem:[%s123 + $0x1b0] sm:$0xff] %v179
      %436 = vst [vmem:[%s123 + $0x1b8] sm:$0xff] %v180
      %437 = vst [vmem:[%s123 + $0x1c0] sm:$0xff] %v181
      %438 = vst [vmem:[%s123 + $0x1c8] sm:$0xff] %v182
      %439 = vst [vmem:[%s123 + $0x1d0] sm:$0xff] %v183
      %440 = vst [vmem:[%s123 + $0x1d8] sm:$0xff] %v184
      %441 = vst [vmem:[%s123 + $0x1e0] sm:$0xff] %v185
      %442 = vst [vmem:[%s123 + $0x1e8] sm:$0xff] %v186
      %443 = vst [vmem:[%s123 + $0x1f0] sm:$0xff] %v187
      %444 = vst [vmem:[%s123 + $0x1f8] sm:$0xff] %v188
      %445 = vst [vmem:[%s123 + $0x200] sm:$0xff] %v189
      %446 = vst [vmem:[%s123 + $0x208] sm:$0xff] %v190
      %447 = vst [vmem:[%s123 + $0x210] sm:$0xff] %v191
      %448 = vst [vmem:[%s123 + $0x218] sm:$0xff] %v192
      %449 = vst [vmem:[%s123 + $0x220] sm:$0xff] %v193
      %450 = vst [vmem:[%s123 + $0x228] sm:$0xff] %v194
      %451 = vst [vmem:[%s123 + $0x230] sm:$0xff] %v195
      %452 = vst [vmem:[%s123 + $0x238] sm:$0xff] %v196
      %453 = vst [vmem:[%s123 + $0x240] sm:$0xff] %v197
      %454 = vst [vmem:[%s123 + $0x248] sm:$0xff] %v198
      %455 = vst [vmem:[%s123 + $0x250] sm:$0xff] %v199
      %456 = vst [vmem:[%s123 + $0x258] sm:$0xff] %v200
      %457 = vst [vmem:[%s123 + $0x260] sm:$0xff] %v201
      %458 = vst [vmem:[%s123 + $0x268] sm:$0xff] %v202
      %459 = vst [vmem:[%s123 + $0x270] sm:$0xff] %v203
      %460 = vst [vmem:[%s123 + $0x278] sm:$0xff] %v204
      %461 = vst [vmem:[%s123 + $0x280] sm:$0xff] %v205
      %462 = vst [vmem:[%s123 + $0x288] sm:$0xff] %v206
      %463 = vst [vmem:[%s123 + $0x290] sm:$0xff] %v207
      %464 = vst [vmem:[%s123 + $0x298] sm:$0xff] %v208
      %465 = vst [vmem:[%s123 + $0x2a0] sm:$0xff] %v209
      %466 = vst [vmem:[%s123 + $0x2a8] sm:$0xff] %v210
      %467 = vst [vmem:[%s123 + $0x2b0] sm:$0xff] %v211
      %468 = vst [vmem:[%s123 + $0x2b8] sm:$0xff] %v212
      %469 = vst [vmem:[%s123 + $0x2c0] sm:$0xff] %v213
      %470 = vst [vmem:[%s123 + $0x2c8] sm:$0xff] %v214
      %471 = vst [vmem:[%s123 + $0x2d0] sm:$0xff] %v215
      %472 = vst [vmem:[%s123 + $0x2d8] sm:$0xff] %v216
      %473 = vst [vmem:[%s123 + $0x2e0] sm:$0xff] %v217
      %474 = vst [vmem:[%s123 + $0x2e8] sm:$0xff] %v218
      %475 = vst [vmem:[%s123 + $0x2f0] sm:$0xff] %v219
      %476 = vst [vmem:[%s123 + $0x2f8] sm:$0xff] %v220
      %477 = vst [vmem:[%s123 + $0x300] sm:$0xff] %v221
      %478 = vst [vmem:[%s123 + $0x308] sm:$0xff] %v222
      %479 = vst [vmem:[%s123 + $0x310] sm:$0xff] %v223
      %480 = vst [vmem:[%s123 + $0x318] sm:$0xff] %v224
      %481 = vst [vmem:[%s123 + $0x320] sm:$0xff] %v225
      %482 = vst [vmem:[%s123 + $0x328] sm:$0xff] %v226
      %483 = vst [vmem:[%s123 + $0x330] sm:$0xff] %v227
      %484 = vst [vmem:[%s123 + $0x338] sm:$0xff] %v228
      %485 = vst [vmem:[%s123 + $0x340] sm:$0xff] %v229
      %486 = vst [vmem:[%s123 + $0x348] sm:$0xff] %v230
      %487 = vst [vmem:[%s123 + $0x350] sm:$0xff] %v231
      %488 = vst [vmem:[%s123 + $0x358] sm:$0xff] %v232
      %489 = vst [vmem:[%s123 + $0x360] sm:$0xff] %v233
      %490 = vst [vmem:[%s123 + $0x368] sm:$0xff] %v234
      %491 = vst [vmem:[%s123 + $0x370] sm:$0xff] %v235
      %492 = vst [vmem:[%s123 + $0x378] sm:$0xff] %v236
      %493 = vst [vmem:[%s123 + $0x380] sm:$0xff] %v237
      %494 = vst [vmem:[%s123 + $0x388] sm:$0xff] %v238
      %495 = vst [vmem:[%s123 + $0x390] sm:$0xff] %v239
      %496 = vst [vmem:[%s123 + $0x398] sm:$0xff] %v240
      %497 = vst [vmem:[%s123 + $0x3a0] sm:$0xff] %v241
      %498 = vst [vmem:[%s123 + $0x3a8] sm:$0xff] %v242
      %499 = vst [vmem:[%s123 + $0x3b0] sm:$0xff] %v243
      %500 = vst [vmem:[%s123 + $0x3b8] sm:$0xff] %v244
      %501 = vst [vmem:[%s123 + $0x3c0] sm:$0xff] %v245
      %502 = vst [vmem:[%s123 + $0x3c8] sm:$0xff] %v246
      %503 = vst [vmem:[%s123 + $0x3d0] sm:$0xff] %v247
      %504 = vst [vmem:[%s123 + $0x3d8] sm:$0xff] %v248
      %505 = vst [vmem:[%s123 + $0x3e0] sm:$0xff] %v249
      %506 = vst [vmem:[%s123 + $0x3e8] sm:$0xff] %v250
      %507 = vst [vmem:[%s123 + $0x3f0] sm:$0xff] %v251
      %508 = vst [vmem:[%s123 + $0x3f8] sm:$0xff] %v252
      %509 = vst [vmem:[%s123 + $0x400] sm:$0xff] %v253
      %510 = vst [vmem:[%s123 + $0x408] sm:$0xff] %v254
      %511 = vst [vmem:[%s123 + $0x410] sm:$0xff] %v255
      %512 = vst [vmem:[%s123 + $0x418] sm:$0xff] %v256
      %513 = vst [vmem:[%s123 + $0x420] sm:$0xff] %v257
      %514 = vst [vmem:[%s123 + $0x428] sm:$0xff] %v258
      %515 = vst [vmem:[%s123 + $0x430] sm:$0xff] %v259
      %516 = vst [vmem:[%s123 + $0x438] sm:$0xff] %v260
      %517 = vst [vmem:[%s123 + $0x440] sm:$0xff] %v261
      %518 = vst [vmem:[%s123 + $0x448] sm:$0xff] %v262
      %519 = vst [vmem:[%s123 + $0x450] sm:$0xff] %v263
      %520 = vst [vmem:[%s123 + $0x458] sm:$0xff] %v264
      %521 = vst [vmem:[%s123 + $0x460] sm:$0xff] %v265
      %522 = vst [vmem:[%s123 + $0x468] sm:$0xff] %v266
      %523 = vst [vmem:[%s123 + $0x470] sm:$0xff] %v267
      %524 = vst [vmem:[%s123 + $0x478] sm:$0xff] %v268
      %525 = vst [vmem:[%s123 + $0x480] sm:$0xff] %v269
      %526 = vst [vmem:[%s123 + $0x488] sm:$0xff] %v270
      %527 = vst [vmem:[%s123 + $0x490] sm:$0xff] %v271
      %528 = vst [vmem:[%s123 + $0x498] sm:$0xff] %v272
      %529 = vst [vmem:[%s123 + $0x4a0] sm:$0xff] %v273
      %530 = vst [vmem:[%s123 + $0x4a8] sm:$0xff] %v274
      %531 = vst [vmem:[%s123 + $0x4b0] sm:$0xff] %v275
      %532 = vst [vmem:[%s123 + $0x4b8] sm:$0xff] %v276
      %533 = vst [vmem:[%s123 + $0x4c0] sm:$0xff] %v277
      %534 = vst [vmem:[%s123 + $0x4c8] sm:$0xff] %v278
      %535 = vst [vmem:[%s123 + $0x4d0] sm:$0xff] %v279
      %536 = vst [vmem:[%s123 + $0x4d8] sm:$0xff] %v280
      %537 = vst [vmem:[%s123 + $0x4e0] sm:$0xff] %v281
      %538 = vst [vmem:[%s123 + $0x4e8] sm:$0xff] %v282
      %539 = vst [vmem:[%s123 + $0x4f0] sm:$0xff] %v283
      %540 = vst [vmem:[%s123 + $0x4f8] sm:$0xff] %v284
      %541 = vst [vmem:[%s123 + $0x500] sm:$0xff] %v285
      %542 = vst [vmem:[%s123 + $0x508] sm:$0xff] %v286
      %543 = vst [vmem:[%s123 + $0x510] sm:$0xff] %v287
      %544 = vst [vmem:[%s123 + $0x518] sm:$0xff] %v288
      %545 = vst [vmem:[%s123 + $0x520] sm:$0xff] %v289
      %546 = vst [vmem:[%s123 + $0x528] sm:$0xff] %v290
      %547 = vst [vmem:[%s123 + $0x530] sm:$0xff] %v291
      %548 = vst [vmem:[%s123 + $0x538] sm:$0xff] %v292
      %549 = vst [vmem:[%s123 + $0x540] sm:$0xff] %v293
      %550 = vst [vmem:[%s123 + $0x548] sm:$0xff] %v294
      %551 = vst [vmem:[%s123 + $0x550] sm:$0xff] %v295
      %552 = vst [vmem:[%s123 + $0x558] sm:$0xff] %v296
      %553 = vst [vmem:[%s123 + $0x560] sm:$0xff] %v297
      %554 = vst [vmem:[%s123 + $0x568] sm:$0xff] %v298
      %555 = vst [vmem:[%s123 + $0x570] sm:$0xff] %v299
      %556 = vst [vmem:[%s123 + $0x578] sm:$0xff] %v300
      %557 = vst [vmem:[%s123 + $0x580] sm:$0xff] %v301
      %558 = vst [vmem:[%s123 + $0x588] sm:$0xff] %v302
      %559 = vst [vmem:[%s123 + $0x590] sm:$0xff] %v303
      %560 = vst [vmem:[%s123 + $0x598] sm:$0xff] %v304
      %561 = vst [vmem:[%s123 + $0x5a0] sm:$0xff] %v305
      %562 = vst [vmem:[%s123 + $0x5a8] sm:$0xff] %v306
      %563 = vst [vmem:[%s123 + $0x5b0] sm:$0xff] %v307
      %564 = vst [vmem:[%s123 + $0x5b8] sm:$0xff] %v308
      %565 = vst [vmem:[%s123 + $0x5c0] sm:$0xff] %v309
      %566 = vst [vmem:[%s123 + $0x5c8] sm:$0xff] %v310
      %567 = vst [vmem:[%s123 + $0x5d0] sm:$0xff] %v311
      %568 = vst [vmem:[%s123 + $0x5d8] sm:$0xff] %v312
      %569 = vst [vmem:[%s123 + $0x5e0] sm:$0xff] %v313
      %570 = vst [vmem:[%s123 + $0x5e8] sm:$0xff] %v314
      %571 = vst [vmem:[%s123 + $0x5f0] sm:$0xff] %v315
      %572 = vst [vmem:[%s123 + $0x5f8] sm:$0xff] %v316
      %573 = vst [vmem:[%s123 + $0x600] sm:$0xff] %v317
      %574 = vst [vmem:[%s123 + $0x608] sm:$0xff] %v318
      %575 = vst [vmem:[%s123 + $0x610] sm:$0xff] %v319
      %576 = vst [vmem:[%s123 + $0x618] sm:$0xff] %v320
      %577 = vst [vmem:[%s123 + $0x620] sm:$0xff] %v321
      %578 = vst [vmem:[%s123 + $0x628] sm:$0xff] %v322
      %579 = vst [vmem:[%s123 + $0x630] sm:$0xff] %v323
      %580 = vst [vmem:[%s123 + $0x638] sm:$0xff] %v324
      %581 = vst [vmem:[%s123 + $0x640] sm:$0xff] %v325
      %582 = vst [vmem:[%s123 + $0x648] sm:$0xff] %v326
      %583 = vst [vmem:[%s123 + $0x650] sm:$0xff] %v327
      %584 = vst [vmem:[%s123 + $0x658] sm:$0xff] %v328
      %585 = vst [vmem:[%s123 + $0x660] sm:$0xff] %v329
      %586 = vst [vmem:[%s123 + $0x668] sm:$0xff] %v330
      %587 = vst [vmem:[%s123 + $0x670] sm:$0xff] %v331
      %588 = vst [vmem:[%s123 + $0x678] sm:$0xff] %v332
      %589 = vst [vmem:[%s123 + $0x680] sm:$0xff] %v333
      %590 = vst [vmem:[%s123 + $0x688] sm:$0xff] %v334
      %591 = vst [vmem:[%s123 + $0x690] sm:$0xff] %v335
      %592 = vst [vmem:[%s123 + $0x698] sm:$0xff] %v336
      %593 = vst [vmem:[%s123 + $0x6a0] sm:$0xff] %v337
      %594 = vst [vmem:[%s123 + $0x6a8] sm:$0xff] %v338
      %595 = vst [vmem:[%s123 + $0x6b0] sm:$0xff] %v339
      %596 = vst [vmem:[%s123 + $0x6b8] sm:$0xff] %v340
      %597 = vst [vmem:[%s123 + $0x6c0] sm:$0xff] %v341
      %598 = vst [vmem:[%s123 + $0x6c8] sm:$0xff] %v342
      %599 = vst [vmem:[%s123 + $0x6d0] sm:$0xff] %v343
      %600 = vst [vmem:[%s123 + $0x6d8] sm:$0xff] %v344
      %601 = vst [vmem:[%s123 + $0x6e0] sm:$0xff] %v345
      %602 = vst [vmem:[%s123 + $0x6e8] sm:$0xff] %v346
      %603 = vst [vmem:[%s123 + $0x6f0] sm:$0xff] %v347
      %604 = vst [vmem:[%s123 + $0x6f8] sm:$0xff] %v348
      %605 = vst [vmem:[%s123 + $0x700] sm:$0xff] %v349
      %606 = vst [vmem:[%s123 + $0x708] sm:$0xff] %v350
      %607 = vst [vmem:[%s123 + $0x710] sm:$0xff] %v351
      %608 = vst [vmem:[%s123 + $0x718] sm:$0xff] %v352
      %609 = vst [vmem:[%s123 + $0x720] sm:$0xff] %v353
      %610 = vst [vmem:[%s123 + $0x728] sm:$0xff] %v354
      %611 = vst [vmem:[%s123 + $0x730] sm:$0xff] %v355
      %612 = vst [vmem:[%s123 + $0x738] sm:$0xff] %v356
      %613 = vst [vmem:[%s123 + $0x740] sm:$0xff] %v357
      %614 = vst [vmem:[%s123 + $0x748] sm:$0xff] %v358
      %615 = vst [vmem:[%s123 + $0x750] sm:$0xff] %v359
      %616 = vst [vmem:[%s123 + $0x758] sm:$0xff] %v360
      %617 = vst [vmem:[%s123 + $0x760] sm:$0xff] %v361
      %618 = vst [vmem:[%s123 + $0x768] sm:$0xff] %v362
      %619 = vst [vmem:[%s123 + $0x770] sm:$0xff] %v363
      %620 = vst [vmem:[%s123 + $0x778] sm:$0xff] %v364
      %621 = vst [vmem:[%s123 + $0x780] sm:$0xff] %v365
      %622 = vst [vmem:[%s123 + $0x788] sm:$0xff] %v366
      %623 = vst [vmem:[%s123 + $0x790] sm:$0xff] %v367
      %624 = vst [vmem:[%s123 + $0x798] sm:$0xff] %v368
      %625 = vst [vmem:[%s123 + $0x7a0] sm:$0xff] %v369
      %626 = vst [vmem:[%s123 + $0x7a8] sm:$0xff] %v370
      %627 = vst [vmem:[%s123 + $0x7b0] sm:$0xff] %v371
      %628 = vst [vmem:[%s123 + $0x7b8] sm:$0xff] %v372
      %629 = vst [vmem:[%s123 + $0x7c0] sm:$0xff] %v373
      %630 = vst [vmem:[%s123 + $0x7c8] sm:$0xff] %v374
      %631 = vst [vmem:[%s123 + $0x7d0] sm:$0xff] %v375
      %632 = vst [vmem:[%s123 + $0x7d8] sm:$0xff] %v376
      %633 = vst [vmem:[%s123 + $0x7e0] sm:$0xff] %v377
      %634 = vst [vmem:[%s123 + $0x7e8] sm:$0xff] %v378
      %635 = vst [vmem:[%s123 + $0x7f0] sm:$0xff] %v379
      %636 = vst [vmem:[%s123 + $0x7f8] sm:$0xff] %v380
      %s637 = smul.u32 32, %s12
      %p638 = scmp.lt.s32.totalorder %s637, 63
      %s639 = scalar_select %p638, %s637, 63
      %s640 = smul.addr %s639, 8
      %s641 = smul.addr %s640, 8
      %s642 = scalar_lea.vmem %s1, %s641
      // Predicated region
      $region25: #{_flatten_copy.1} parent=23 // pred_check
        %p643 = pneg %p56
      $region26: #{_flatten_copy.1} parent=23 // pred_check_branch
        %645 = sbr.rel (%p643) target = $region28
      $region27: #{_flatten_copy.1} parent=23 // pred_region
        %s646 = smul.u32 32, %s12
      $region28: #{_flatten_copy.1} parent=23 // pred_fallthru
        _
    $region24: #{_flatten_copy.1} parent=5 // pred_fallthru
      _
    %p647 = scmp.le.s32.totalorder 2, %s7
    // Predicated region
    $region29: #{_flatten_copy.1} parent=5 // pred_check
      %p648 = pneg %p647
    $region30: #{_flatten_copy.1} parent=5 // pred_check_branch
      %650 = sbr.rel (%p648) target = $region32
    $region31: #{_flatten_copy.1} parent=5 // pred_region
      %s651 = ssub.s32 %s7, 2
      // Predicated region
      $region33: #{_flatten_copy.1} parent=31 // pred_check
        %p652 = pneg %p62
      $region34: #{_flatten_copy.1} parent=31 // pred_check_branch
        %654 = sbr.rel (%p652) target = $region36
      $region35: #{_flatten_copy.1} parent=31 // pred_region
        %s655 = smul.u32 32, %s13
        %p656 = scmp.lt.s32.totalorder %s655, 63
        %s657 = scalar_select %p656, %s655, 63
        %s658 = smul.addr %s657, 8
        %s659 = smul.addr %s658, 8
        %s660 = scalar_lea.vmem %s1, %s659
      $region36: #{_flatten_copy.1} parent=31 // pred_fallthru
        _
    $region32: #{_flatten_copy.1} parent=5 // pred_fallthru
      _
  $region6: #{_flatten_copy.1} parent=0 // loop_footer
    %s11 = sadd.s32 1, %s7
  $region7: #{_flatten_copy.1} parent=0 // loop_footer_branch
    %6 = sbr.rel target = $region3
  $region8: #{_flatten_copy.1} parent=0 // loop_exit
    _

</llo_original>
